<compile_context>
chip_gen: v7x
topology: tpu7x:2x2x1
jax: 0.10.0
libtpu: 0.0.40
codegen_flags: <defaults>
</compile_context>

<pallas_src>
import jax
import jax.numpy as jnp
from jax.experimental import pallas as pl
from jax.experimental.pallas import tpu as pltpu

_LANE = 128
_SMALL_C_MAX = 32      # classes <= this -> batch-on-lanes (lane-dense) layout


def _round_up(x, m):
    return ((x + m - 1) // m) * m


def _vmem_limit_bytes():
    """Generation-aware scoped-VMEM limit (v7x has only 64 MiB physical)."""
    try:
        phys = int(pltpu.get_tpu_info().vmem_capacity_bytes)
    except Exception:                      # no TPU info at trace time -> conservative
        phys = 64 * 1024 * 1024
    if phys <= 64 * 1024 * 1024:
        return 40 * 1024 * 1024            # v7x
    return 64 * 1024 * 1024                # v5e / v6e (128 MiB physical)


def _pick_tile(n, c, isz_ft, isz_fnf, gran, tile_budget, tn_user):
    """Batch-tile extent: as big as the VMEM budget allows (amortize the ~0.35us
    grid-step overhead), counting the f32 in-kernel temporaries, but never fewer
    than 2 blocks when there is enough work (v7x megacore)."""
    if tn_user is not None:
        tn = _round_up(int(tn_user), gran)
    else:
        per_elem = (2 * (c * isz_ft + 2 * isz_fnf + 4)   # double-buffered inputs
                    + 6 * 4 * c                          # ~(tile, C) f32 temporaries
                    + 16 * 4)                            # small per-row temporaries
        tn = max(gran, (tile_budget // per_elem) // gran * gran)
    tn = min(tn, _round_up(n, gran))
    if tn_user is None:
        if n > gran:                       # >=2 blocks -> both v7x TensorCores busy
            tn = min(tn, _round_up(pl.cdiv(n, 2), gran))
        if n >= 16 * 1024:                 # deeper grid for pipelining on big batches
            tn = min(tn, max(8 * gran, _round_up(pl.cdiv(n, 8), gran)))
    tn = max(gran, int(tn))
    if tn >= n:                            # single block: use exact full-dim block
        tn = n
    return tn


def _emit_partials(s_fnf, s_ft, n_fish, out_ref):
    # Lane-dense partial-sum slab: lanes {0,1,2} = (sum_fnf, sum_ft, n_fish).
    lane = jax.lax.broadcasted_iota(jnp.int32, (1, _LANE), 1)
    out_ref[...] = jnp.where(
        lane == 0, s_fnf,
        jnp.where(lane == 1, s_ft, jnp.where(lane == 2, n_fish, 0.0)))


def _make_lane_major_kernel(n_valid, tn, c):
    """Small-C path: classes on sublanes, batch on lanes (fully lane-dense)."""

    def kernel(fnf_ref, ft_ref, tgt_ref, out_ref):
        blk = pl.program_id(0)
        tgt = tgt_ref[...]                                        # (1, tn) int32
        col = jax.lax.broadcasted_iota(jnp.int32, (1, tn), 1) + blk * tn
        valid = col < n_valid                                     # ragged-tail mask
        is_fish = tgt > 0
        fish = jnp.logical_and(valid, is_fish)

        # fish / not-fish CE as binary CE on the logit difference:
        #   CE([x0, x1], t) = softplus(x1 - x0) - t * (x1 - x0),  t in {0, 1}
        fnf = fnf_ref[...].astype(jnp.float32)                    # (2, tn)
        d = fnf[1:2, :] - fnf[0:1, :]                             # (1, tn)
        t_f = is_fish.astype(jnp.float32)
        softplus_d = jnp.maximum(d, 0.0) + jnp.log(1.0 + jnp.exp(-jnp.abs(d)))
        loss_fnf = jnp.where(valid, softplus_d - t_f * d, 0.0)

        # fish-type CE: per-row softmax stats via a short unrolled loop over the
        # C class rows -> pure elementwise work on lane-dense (1, tn) vregs.
        ft = ft_ref[...].astype(jnp.float32)                      # (C, tn)
        m2 = ft[0:1, :]
        for k in range(1, c):
            m2 = jnp.maximum(m2, ft[k:k + 1, :])
        tgt_idx = tgt - 1
        sum_exp = jnp.zeros((1, tn), jnp.float32)
        z_pick = jnp.zeros((1, tn), jnp.float32)
        # TODO(synk): targets > C silently pick z=0 instead of erroring like
        # PyTorch CrossEntropyLoss; inputs are assumed valid.
        for k in range(c):
            z_k = ft[k:k + 1, :] - m2
            sum_exp = sum_exp + jnp.exp(z_k)
            z_pick = jnp.where(tgt_idx == k, z_k, z_pick)
        loss_ft = jnp.where(fish, jnp.log(sum_exp) - z_pick, 0.0)

        _emit_partials(jnp.sum(loss_fnf), jnp.sum(loss_ft),
                       jnp.sum(jnp.where(fish, 1.0, 0.0)), out_ref)

    return kernel


def _make_sublane_major_kernel(n_valid, tn):
    """Large-C path: natural (N, C) layout, batch on sublanes."""

    def kernel(fnf_ref, ft_ref, tgt_ref, out_ref):
        blk = pl.program_id(0)
        tgt = tgt_ref[...]                                        # (tn, 1) int32
        row = jax.lax.broadcasted_iota(jnp.int32, (tn, 1), 0) + blk * tn
        valid = row < n_valid
        is_fish = tgt > 0
        fish = jnp.logical_and(valid, is_fish)

        fnf = fnf_ref[...].astype(jnp.float32)                    # (tn, 2)
        d = fnf[:, 1:2] - fnf[:, 0:1]
        t_f = is_fish.astype(jnp.float32)
        softplus_d = jnp.maximum(d, 0.0) + jnp.log(1.0 + jnp.exp(-jnp.abs(d)))
        loss_fnf = jnp.where(valid, softplus_d - t_f * d, 0.0)

        ft = ft_ref[...].astype(jnp.float32)                      # (tn, C)
        z = ft - jnp.max(ft, axis=-1, keepdims=True)              # max-shifted once
        sum_exp = jnp.sum(jnp.exp(z), axis=-1, keepdims=True)
        idx_c = jax.lax.broadcasted_iota(jnp.int32, ft.shape, 1)
        # TODO(synk): targets > C silently pick z=0 instead of erroring.
        z_pick = jnp.sum(jnp.where(idx_c == (tgt - 1), z, 0.0),
                         axis=-1, keepdims=True)
        loss_ft = jnp.where(fish, jnp.log(sum_exp) - z_pick, 0.0)

        _emit_partials(jnp.sum(loss_fnf), jnp.sum(loss_ft),
                       jnp.sum(jnp.where(fish, 1.0, 0.0)), out_ref)

    return kernel


def hierarchical_loss(fish_not_fish_logits, fish_type_logits, targets, *, tn=None):
    """outputs = (fish_not_fish_logits (N, 2), fish_type_logits (N, C)),
    targets (N,) int with 0 = not-fish, 1..C = fish type. reduction='mean'."""
    n = int(fish_not_fish_logits.shape[0])
    c = int(fish_type_logits.shape[1])

    # TODO(synk): targets could be narrowed to int16/int8 (saves 20-25% of HBM
    # read bytes for bf16 + tiny C); kept int32 for robust Pallas int handling.
    tgt = targets.astype(jnp.int32)

    isz_ft = int(jnp.dtype(fish_type_logits.dtype).itemsize)
    isz_fnf = int(jnp.dtype(fish_not_fish_logits.dtype).itemsize)

    vmem_limit = _vmem_limit_bytes()
    tile_budget = vmem_limit // 2          # headroom for Mosaic internals / output

    lane_major = c <= _SMALL_C_MAX
    if lane_major:
        gran = _LANE                       # tile extent counted in lanes
    else:
        # sublane multiple required by the narrowest logits dtype (8 f32 / 16 bf16)
        gran = max(8, 32 // max(min(isz_ft, isz_fnf), 1))

    tn_blk = _pick_tile(n, c, isz_ft, isz_fnf, gran, tile_budget, tn)
    num_blocks = pl.cdiv(n, tn_blk)

    cost = pl.CostEstimate(
        flops=int(10 * n * c + 32 * n),
        transcendentals=int(n * c + 3 * n),
        bytes_accessed=int(n * c * isz_ft + 2 * n * isz_fnf + 4 * n
                           + num_blocks * _LANE * 4),
    )
    cparams = pltpu.CompilerParams(
        dimension_semantics=("parallel",),
        vmem_limit_bytes=vmem_limit,
    )
    out_shape = jax.ShapeDtypeStruct((num_blocks, _LANE), jnp.float32)
    out_spec = pl.BlockSpec((1, _LANE), lambda i: (i, 0))

    if lane_major:
        # One cheap wrapper transpose (tiny for small C) buys full 128-lane
        # utilization in every vreg of the kernel.
        fnf_t = jnp.transpose(fish_not_fish_logits)               # (2, N)
        ft_t = jnp.transpose(fish_type_logits)                    # (C, N)
        tgt_t = tgt.reshape(1, n)
        partials = pl.pallas_call(
            _make_lane_major_kernel(n, tn_blk, c),
            out_shape=out_shape,
            grid=(num_blocks,),
            in_specs=[
                pl.BlockSpec((2, tn_blk), lambda i: (0, i)),
                pl.BlockSpec((c, tn_blk), lambda i: (0, i)),
                pl.BlockSpec((1, tn_blk), lambda i: (0, i)),
            ],
            out_specs=out_spec,
            compiler_params=cparams,
            cost_estimate=cost,
        )(fnf_t, ft_t, tgt_t)
    else:
        tgt_col = tgt.reshape(n, 1)
        partials = pl.pallas_call(
            _make_sublane_major_kernel(n, tn_blk),
            out_shape=out_shape,
            grid=(num_blocks,),
            in_specs=[
                pl.BlockSpec((tn_blk, 2), lambda i: (i, 0)),
                pl.BlockSpec((tn_blk, c), lambda i: (i, 0)),
                pl.BlockSpec((tn_blk, 1), lambda i: (i, 0)),
            ],
            out_specs=out_spec,
            compiler_params=cparams,
            cost_estimate=cost,
        )(fish_not_fish_logits, fish_type_logits, tgt_col)

    sum_fnf = jnp.sum(partials[:, 0])
    sum_ft = jnp.sum(partials[:, 1])
    n_fish = jnp.sum(partials[:, 2])
    fnf_loss = sum_fnf / jnp.float32(n)                               # mean over batch
    ft_loss = jnp.where(n_fish > 0.0,
                        sum_ft / jnp.maximum(n_fish, 1.0),            # mean over fish
                        0.0)
    return fnf_loss + ft_loss


def _reference(fnf, ft, tgt):
    """Pure-JAX reference mirroring the PyTorch module (reduction='mean')."""
    fnf = fnf.astype(jnp.float32)
    ft = ft.astype(jnp.float32)
    b = (tgt > 0).astype(jnp.int32)
    logp1 = jax.nn.log_softmax(fnf, axis=-1)
    l1 = -jnp.take_along_axis(logp1, b[:, None], axis=-1)[:, 0]
    loss1 = jnp.mean(l1)
    mask = tgt > 0
    logp2 = jax.nn.log_softmax(ft, axis=-1)
    safe_idx = jnp.maximum(tgt - 1, 0)
    l2 = -jnp.take_along_axis(logp2, safe_idx[:, None], axis=-1)[:, 0]
    n_fish = jnp.sum(mask)
    loss2 = jnp.where(n_fish > 0,
                      jnp.sum(jnp.where(mask, l2, 0.0)) / jnp.maximum(n_fish, 1),
                      0.0)
    return loss1 + loss2


if __name__ == "__main__":
    key = jax.random.PRNGKey(0)

    # Case 1: small f32 batch, lane-dense path, single full-extent block.
    k1, k2, k3 = jax.random.split(key, 3)
    N, C = 8, 4
    fnf = jax.random.normal(k1, (N, 2), dtype=jnp.float32)
    ft = jax.random.normal(k2, (N, C), dtype=jnp.float32)
    tgt = jax.random.randint(k3, (N,), 0, C + 1, dtype=jnp.int32)
    loss = jax.block_until_ready(hierarchical_loss(fnf, ft, tgt))
    ref = jax.block_until_ready(_reference(fnf, ft, tgt))
    assert jnp.allclose(loss, ref, atol=1e-4, rtol=1e-4), (loss, ref)

    # Case 2: bf16 logits, ragged multi-block 'parallel' grid, no wrapper pad.
    k4, k5, k6 = jax.random.split(k3, 3)
    N2, C2 = 300, 5
    fnf2 = jax.random.normal(k4, (N2, 2), dtype=jnp.bfloat16)
    ft2 = jax.random.normal(k5, (N2, C2), dtype=jnp.bfloat16)
    tgt2 = jax.random.randint(k6, (N2,), 0, C2 + 1, dtype=jnp.int32)
    loss2 = jax.block_until_ready(hierarchical_loss(fnf2, ft2, tgt2, tn=128))
    ref2 = jax.block_until_ready(_reference(fnf2, ft2, tgt2))
    assert jnp.allclose(loss2, ref2, atol=1e-3, rtol=1e-3), (loss2, ref2)

    # Case 3: no fish at all -> fish-type branch contributes exactly 0.
    tgt3 = jnp.zeros((N,), dtype=jnp.int32)
    loss3 = jax.block_until_ready(hierarchical_loss(fnf, ft, tgt3))
    ref3 = jax.block_until_ready(_reference(fnf, ft, tgt3))
    assert jnp.allclose(loss3, ref3, atol=1e-4, rtol=1e-4), (loss3, ref3)

    # Case 4: larger class count -> natural (N, C) sublane path, ragged tail.
    k7, k8, k9 = jax.random.split(k6, 3)
    N4, C4 = 50, 64
    fnf4 = jax.random.normal(k7, (N4, 2), dtype=jnp.float32)
    ft4 = jax.random.normal(k8, (N4, C4), dtype=jnp.float32)
    tgt4 = jax.random.randint(k9, (N4,), 0, C4 + 1, dtype=jnp.int32)
    loss4 = jax.block_until_ready(hierarchical_loss(fnf4, ft4, tgt4))
    ref4 = jax.block_until_ready(_reference(fnf4, ft4, tgt4))
    assert jnp.allclose(loss4, ref4, atol=1e-4, rtol=1e-4), (loss4, ref4)

    print("KERNEL_OK")
</pallas_src>

<mosaic_0001>
module attributes {stable_mosaic.version = 11 : i64} {
  func.func @kernel(%arg0: i32, %arg1: memref<2x8xf32, #tpu.memory_space<vmem>>, %arg2: memref<4x8xf32, #tpu.memory_space<vmem>>, %arg3: memref<1x8xi32, #tpu.memory_space<vmem>>, %arg4: memref<1x128xf32, #tpu.memory_space<vmem>>) attributes {dimension_semantics = [#tpu.dimension_semantics<parallel>], iteration_bounds = array<i64: 1>, scalar_prefetch = 0 : i64, scratch_operands = 0 : i64, tpu.core_type = #tpu.core_type<tc>, window_params = [{transform_indices = @transform_0, window_bounds = array<i64: 2, 8>}, {transform_indices = @transform_1, window_bounds = array<i64: 4, 8>}, {transform_indices = @transform_2, window_bounds = array<i64: 1, 8>}, {transform_indices = @transform_3, window_bounds = array<i64: 1, 128>}]} {
    %c0 = arith.constant 0 : index
    %c0_0 = arith.constant 0 : index
    %0 = vector.load %arg3[%c0, %c0_0] : memref<1x8xi32, #tpu.memory_space<vmem>>, vector<1x8xi32>
    %1 = tpu.iota {dimensions = array<i32: 1>} : vector<1x8xi32>
    %c8_i32 = arith.constant 8 : i32
    %2 = arith.muli %arg0, %c8_i32 : i32
    %3 = vector.broadcast %2 : i32 to vector<1x8xi32>
    %4 = arith.addi %1, %3 : vector<1x8xi32>
    %c8_i32_1 = arith.constant 8 : i32
    %5 = vector.broadcast %c8_i32_1 : i32 to vector<1x8xi32>
    %6 = arith.cmpi slt, %4, %5 : vector<1x8xi32>
    %c0_i32 = arith.constant 0 : i32
    %7 = vector.broadcast %c0_i32 : i32 to vector<1x8xi32>
    %8 = arith.cmpi sgt, %0, %7 : vector<1x8xi32>
    %9 = arith.andi %6, %8 : vector<1x8xi1>
    %c0_2 = arith.constant 0 : index
    %c0_3 = arith.constant 0 : index
    %10 = vector.load %arg1[%c0_2, %c0_3] : memref<2x8xf32, #tpu.memory_space<vmem>>, vector<2x8xf32>
    %11 = vector.extract_strided_slice %10 {offsets = [1, 0], sizes = [1, 8], strides = [1, 1]} : vector<2x8xf32> to vector<1x8xf32>
    %12 = vector.extract_strided_slice %10 {offsets = [0, 0], sizes = [1, 8], strides = [1, 1]} : vector<2x8xf32> to vector<1x8xf32>
    %13 = arith.subf %11, %12 : vector<1x8xf32>
    %14 = arith.extui %8 : vector<1x8xi1> to vector<1x8xi32>
    %15 = arith.sitofp %14 : vector<1x8xi32> to vector<1x8xf32>
    %cst = arith.constant 0.000000e+00 : f32
    %16 = vector.broadcast %cst : f32 to vector<1x8xf32>
    %17 = arith.maximumf %13, %16 : vector<1x8xf32>
    %18 = math.absf %13 : vector<1x8xf32>
    %cst_4 = arith.constant 0.000000e+00 : f32
    %19 = vector.broadcast %cst_4 : f32 to vector<1x8xf32>
    %20 = arith.subf %19, %18 : vector<1x8xf32>
    %21 = math.exp %20 : vector<1x8xf32>
    %cst_5 = arith.constant 1.000000e+00 : f32
    %22 = vector.broadcast %cst_5 : f32 to vector<1x8xf32>
    %23 = arith.addf %22, %21 : vector<1x8xf32>
    %24 = math.log %23 : vector<1x8xf32>
    %25 = arith.addf %17, %24 : vector<1x8xf32>
    %26 = arith.mulf %15, %13 : vector<1x8xf32>
    %27 = arith.subf %25, %26 : vector<1x8xf32>
    %cst_6 = arith.constant 0.000000e+00 : f32
    %28 = vector.broadcast %cst_6 : f32 to vector<1x8xf32>
    %29 = arith.select %6, %27, %28 : vector<1x8xi1>, vector<1x8xf32>
    %c0_7 = arith.constant 0 : index
    %c0_8 = arith.constant 0 : index
    %30 = vector.load %arg2[%c0_7, %c0_8] : memref<4x8xf32, #tpu.memory_space<vmem>>, vector<4x8xf32>
    %31 = vector.extract_strided_slice %30 {offsets = [0, 0], sizes = [1, 8], strides = [1, 1]} : vector<4x8xf32> to vector<1x8xf32>
    %32 = vector.extract_strided_slice %30 {offsets = [1, 0], sizes = [1, 8], strides = [1, 1]} : vector<4x8xf32> to vector<1x8xf32>
    %33 = arith.maximumf %31, %32 : vector<1x8xf32>
    %34 = vector.extract_strided_slice %30 {offsets = [2, 0], sizes = [1, 8], strides = [1, 1]} : vector<4x8xf32> to vector<1x8xf32>
    %35 = arith.maximumf %33, %34 : vector<1x8xf32>
    %36 = vector.extract_strided_slice %30 {offsets = [3, 0], sizes = [1, 8], strides = [1, 1]} : vector<4x8xf32> to vector<1x8xf32>
    %37 = arith.maximumf %35, %36 : vector<1x8xf32>
    %c1_i32 = arith.constant 1 : i32
    %38 = vector.broadcast %c1_i32 : i32 to vector<1x8xi32>
    %39 = arith.subi %0, %38 : vector<1x8xi32>
    %cst_9 = arith.constant 0.000000e+00 : f32
    %40 = vector.broadcast %cst_9 : f32 to vector<1x8xf32>
    %cst_10 = arith.constant 0.000000e+00 : f32
    %41 = vector.broadcast %cst_10 : f32 to vector<1x8xf32>
    %42 = vector.extract_strided_slice %30 {offsets = [0, 0], sizes = [1, 8], strides = [1, 1]} : vector<4x8xf32> to vector<1x8xf32>
    %43 = arith.subf %42, %37 : vector<1x8xf32>
    %44 = math.exp %43 : vector<1x8xf32>
    %45 = arith.addf %40, %44 : vector<1x8xf32>
    %c0_i32_11 = arith.constant 0 : i32
    %46 = vector.broadcast %c0_i32_11 : i32 to vector<1x8xi32>
    %47 = arith.cmpi eq, %39, %46 : vector<1x8xi32>
    %48 = arith.select %47, %43, %41 : vector<1x8xi1>, vector<1x8xf32>
    %49 = vector.extract_strided_slice %30 {offsets = [1, 0], sizes = [1, 8], strides = [1, 1]} : vector<4x8xf32> to vector<1x8xf32>
    %50 = arith.subf %49, %37 : vector<1x8xf32>
    %51 = math.exp %50 : vector<1x8xf32>
    %52 = arith.addf %45, %51 : vector<1x8xf32>
    %c1_i32_12 = arith.constant 1 : i32
    %53 = vector.broadcast %c1_i32_12 : i32 to vector<1x8xi32>
    %54 = arith.cmpi eq, %39, %53 : vector<1x8xi32>
    %55 = arith.select %54, %50, %48 : vector<1x8xi1>, vector<1x8xf32>
    %56 = vector.extract_strided_slice %30 {offsets = [2, 0], sizes = [1, 8], strides = [1, 1]} : vector<4x8xf32> to vector<1x8xf32>
    %57 = arith.subf %56, %37 : vector<1x8xf32>
    %58 = math.exp %57 : vector<1x8xf32>
    %59 = arith.addf %52, %58 : vector<1x8xf32>
    %c2_i32 = arith.constant 2 : i32
    %60 = vector.broadcast %c2_i32 : i32 to vector<1x8xi32>
    %61 = arith.cmpi eq, %39, %60 : vector<1x8xi32>
    %62 = arith.select %61, %57, %55 : vector<1x8xi1>, vector<1x8xf32>
    %63 = vector.extract_strided_slice %30 {offsets = [3, 0], sizes = [1, 8], strides = [1, 1]} : vector<4x8xf32> to vector<1x8xf32>
    %64 = arith.subf %63, %37 : vector<1x8xf32>
    %65 = math.exp %64 : vector<1x8xf32>
    %66 = arith.addf %59, %65 : vector<1x8xf32>
    %c3_i32 = arith.constant 3 : i32
    %67 = vector.broadcast %c3_i32 : i32 to vector<1x8xi32>
    %68 = arith.cmpi eq, %39, %67 : vector<1x8xi32>
    %69 = arith.select %68, %64, %62 : vector<1x8xi1>, vector<1x8xf32>
    %70 = math.log %66 : vector<1x8xf32>
    %71 = arith.subf %70, %69 : vector<1x8xf32>
    %cst_13 = arith.constant 0.000000e+00 : f32
    %72 = vector.broadcast %cst_13 : f32 to vector<1x8xf32>
    %73 = arith.select %9, %71, %72 : vector<1x8xi1>, vector<1x8xf32>
    %74 = vector.shape_cast %29 : vector<1x8xf32> to vector<1x1x8xf32>
    %cst_14 = arith.constant dense<0.000000e+00> : vector<1xf32>
    %75 = vector.multi_reduction <add>, %74, %cst_14 [1, 2] : vector<1x1x8xf32> to vector<1xf32>
    %76 = vector.shape_cast %75 : vector<1xf32> to vector<1x1x1xf32>
    %77 = vector.extract %76[0, 0, 0] : f32 from vector<1x1x1xf32>
    %78 = vector.shape_cast %73 : vector<1x8xf32> to vector<1x1x8xf32>
    %cst_15 = arith.constant dense<0.000000e+00> : vector<1xf32>
    %79 = vector.multi_reduction <add>, %78, %cst_15 [1, 2] : vector<1x1x8xf32> to vector<1xf32>
    %80 = vector.shape_cast %79 : vector<1xf32> to vector<1x1x1xf32>
    %81 = vector.extract %80[0, 0, 0] : f32 from vector<1x1x1xf32>
    %cst_16 = arith.constant 1.000000e+00 : f32
    %cst_17 = arith.constant 0.000000e+00 : f32
    %82 = vector.broadcast %cst_16 : f32 to vector<1x8xf32>
    %83 = vector.broadcast %cst_17 : f32 to vector<1x8xf32>
    %84 = arith.select %9, %82, %83 : vector<1x8xi1>, vector<1x8xf32>
    %85 = vector.shape_cast %84 : vector<1x8xf32> to vector<1x1x8xf32>
    %cst_18 = arith.constant dense<0.000000e+00> : vector<1xf32>
    %86 = vector.multi_reduction <add>, %85, %cst_18 [1, 2] : vector<1x1x8xf32> to vector<1xf32>
    %87 = vector.shape_cast %86 : vector<1xf32> to vector<1x1x1xf32>
    %88 = vector.extract %87[0, 0, 0] : f32 from vector<1x1x1xf32>
    %89 = tpu.iota {dimensions = array<i32: 1>} : vector<1x128xi32>
    %c0_i32_19 = arith.constant 0 : i32
    %90 = vector.broadcast %c0_i32_19 : i32 to vector<1x128xi32>
    %91 = arith.cmpi eq, %89, %90 : vector<1x128xi32>
    %c1_i32_20 = arith.constant 1 : i32
    %92 = vector.broadcast %c1_i32_20 : i32 to vector<1x128xi32>
    %93 = arith.cmpi eq, %89, %92 : vector<1x128xi32>
    %c2_i32_21 = arith.constant 2 : i32
    %94 = vector.broadcast %c2_i32_21 : i32 to vector<1x128xi32>
    %95 = arith.cmpi eq, %89, %94 : vector<1x128xi32>
    %cst_22 = arith.constant 0.000000e+00 : f32
    %96 = vector.broadcast %88 : f32 to vector<1x128xf32>
    %97 = vector.broadcast %cst_22 : f32 to vector<1x128xf32>
    %98 = arith.select %95, %96, %97 : vector<1x128xi1>, vector<1x128xf32>
    %99 = vector.broadcast %81 : f32 to vector<1x128xf32>
    %100 = arith.select %93, %99, %98 : vector<1x128xi1>, vector<1x128xf32>
    %101 = vector.broadcast %77 : f32 to vector<1x128xf32>
    %102 = arith.select %91, %101, %100 : vector<1x128xi1>, vector<1x128xf32>
    %c0_23 = arith.constant 0 : index
    %c0_24 = arith.constant 0 : index
    %103 = vector.load %arg4[%c0_23, %c0_24] : memref<1x128xf32, #tpu.memory_space<vmem>>, vector<1x128xf32>
    tpu.vector_store %arg4[%c0_23, %c0_24], %102 {strides = array<i32>} : memref<1x128xf32, #tpu.memory_space<vmem>>, vector<1x128xf32>,
    return
  }
  func.func @transform_0(%arg0: i32) -> (i32, i32) {
    %c0_i32 = arith.constant 0 : i32
    %c0_i32_0 = arith.constant 0 : i32
    return %c0_i32, %arg0 : i32, i32
  }
  func.func @transform_1(%arg0: i32) -> (i32, i32) {
    %c0_i32 = arith.constant 0 : i32
    %c0_i32_0 = arith.constant 0 : i32
    return %c0_i32, %arg0 : i32, i32
  }
  func.func @transform_2(%arg0: i32) -> (i32, i32) {
    %c0_i32 = arith.constant 0 : i32
    %c0_i32_0 = arith.constant 0 : i32
    return %c0_i32, %arg0 : i32, i32
  }
  func.func @transform_3(%arg0: i32) -> (i32, i32) {
    %c0_i32 = arith.constant 0 : i32
    %c0_i32_0 = arith.constant 0 : i32
    return %arg0, %c0_i32 : i32, i32
  }
}

</mosaic_0001>

<llo_original>
// kernel: tpu_custom_call.1
$region0: #{tpu_custom_call.1}
  #allocation0 [shape = 'u32[]', space=smem, size = 0x4, offset = 0x4, fixed_abs, tag = 'smem constant byte address 0x4 - core index']
  #allocation1 [shape = 'u32[144,128]{1,0:T(1,128)}', space=vmem, size = 0x12000, scoped, tag = 'internal scratch']
  %s0 = inlined_call_operand.hbm [shape: f32[2,8], index: 0, kind: input, shape index: {}]
  %s1 = inlined_call_operand.hbm [shape: f32[4,8], index: 1, kind: input, shape index: {}]
  %s2 = inlined_call_operand.vmem [shape: s32[1,8], index: 2, kind: input, shape index: {}]
  %s3 = inlined_call_operand.hbm [shape: f32[1,128], index: 3, kind: output, shape index: {}]
  %s4 = sld [smem:[#allocation0]]
  $region30: #{tpu_custom_call.1} parent=0
    _
  %s6 = ssub.s32 1, %s4
  %s7 = scalar_select 0, %s6, %s4
  $region1: #{tpu_custom_call.1} parent=0
    #allocation2 [shape = 'u8[1024]{0}', space=vmem, size = 0x400, scoped, tag = 'input window, operand 0, single buffered']
    #allocation3 [shape = 's32[1]{0}', space=sflag, size = 0x4, scoped, tag = 'scoped memory for tpu_custom_call.1']
    #allocation4 [shape = 's32[1]{0}', space=sflag, size = 0x4, scoped, tag = 'scoped memory for tpu_custom_call.1']
    #allocation5 [shape = 'u8[2048]{0}', space=vmem, size = 0x800, scoped, tag = 'input window, operand 1, single buffered']
    #allocation6 [shape = 's32[1]{0}', space=sflag, size = 0x4, scoped, tag = 'scoped memory for tpu_custom_call.1']
    #allocation7 [shape = 'u8[512]{0}', space=vmem, size = 0x400, scoped, tag = 'output window, operand 0, single buffered']
    %8 = vsyncpa [#allocation3], 0
    %9 = vsyncpa [#allocation6], 0
    %10 = vsyncpa [#allocation4], 0
    // Predicated region
    $region2: #{tpu_custom_call.1} parent=1 // pred_check
      _
    $region3: #{tpu_custom_call.1} parent=1 // pred_check_branch
      %12 = sbr.rel (0) target = $region5
    $region4: #{tpu_custom_call.1} parent=1 // pred_region
      %s14 = ssub.s32 32, 32
      %15 = vsyncadd [#allocation3], %s14
      %s17 = sshll.u32 [#allocation2], 4
      %s18 = int_to_ptr.vmem [resolvable:$true] %s17
      %20 = dma.hbm_to_vmem [thread:$0]  %s0, 32, %s18, [#allocation3]
    $region5: #{tpu_custom_call.1} parent=1 // pred_fallthru
      _
    // Predicated region
    $region6: #{tpu_custom_call.1} parent=1 // pred_check
      _
    $region7: #{tpu_custom_call.1} parent=1 // pred_check_branch
      %22 = sbr.rel (0) target = $region9
    $region8: #{tpu_custom_call.1} parent=1 // pred_region
      %s24 = ssub.s32 64, 64
      %25 = vsyncadd [#allocation6], %s24
      %s27 = sshll.u32 [#allocation5], 4
      %s28 = int_to_ptr.vmem [resolvable:$true] %s27
      %30 = dma.hbm_to_vmem [thread:$0]  %s1, 64, %s28, [#allocation6]
    $region9: #{tpu_custom_call.1} parent=1 // pred_fallthru
      _
    // Predicated region
    $region10: #{tpu_custom_call.1} parent=1 // pred_check
      _
    $region11: #{tpu_custom_call.1} parent=1 // pred_check_branch
      %32 = sbr.rel (0) target = $region13
    $region12: #{tpu_custom_call.1} parent=1 // pred_region
      _
    $region13: #{tpu_custom_call.1} parent=1 // pred_fallthru
      _
    // Predicated region
    $region14: #{tpu_custom_call.1} parent=1 // pred_check
      _
    $region15: #{tpu_custom_call.1} parent=1 // pred_check_branch
      %34 = sbr.rel (0) target = $region17
    $region16: #{tpu_custom_call.1} parent=1 // pred_region
      %35 = dma.done [#allocation3], 32
    $region17: #{tpu_custom_call.1} parent=1 // pred_fallthru
      _
    // Predicated region
    $region18: #{tpu_custom_call.1} parent=1 // pred_check
      _
    $region19: #{tpu_custom_call.1} parent=1 // pred_check_branch
      %37 = sbr.rel (0) target = $region21
    $region20: #{tpu_custom_call.1} parent=1 // pred_region
      %38 = dma.done [#allocation6], 64
    $region21: #{tpu_custom_call.1} parent=1 // pred_fallthru
      _
    %v39 = vld [vmem:[%s2] sm:$0x1]
    %v40 = vlaneseq
    %v41 = vand.u32 %v40, 127
    %s42 = smul.u32 0, 8
    %v43 = vstv %s42
    %v44 = vadd.s32 %v41, %v43
    %vm45 = vcmp.lt.s32.totalorder %v44, 8
    %vm46 = vcmp.gt.s32.totalorder %v39, 0
    %vm47 = vmand %vm45, %vm46
    %v48 = vld [vmem:[#allocation2] sm:$0x3]
    %v50 = vrot.slane %v48, 7
    %v52 = vsub.f32 %v48, %v50
    %v53 = vsel %vm46, 1, 0
    %v54 = vcvt.s32.f32 %v53
    %v55 = vmax.f32 %v52, 0.0
    %v56 = vand.u32 2147483647, %v52
    %v57 = vsub.f32 0.0, %v56
    %v58 = vmul.f32 %v57, 1.442695
    %v59 = vpow.pop %v58
    %v60 = vadd.f32 %v59, 1.0
    %v61 = vlog2.pop %v60
    %v62 = vmul.f32 %v61, 0.6931472
    %v63 = vadd.f32 %v55, %v62
    %v66 = vunpack.c.l.s4 1966171168
    %v67 = vunpack.c.0.s8 %v66
    %v68 = vlaneseq
    %v69 = vshrl.u32 %v68, 7
    %v70 = vsub.s32 %v67, %v69
    %v71 = vrot.slane %v52, %v70
    %v72 = vcombine.high %v71, %v71
    %v74 = vunpack.c.l.s4 1966171168
    %v75 = vunpack.c.0.s8 %v74
    %v76 = vlaneseq
    %v77 = vshrl.u32 %v76, 7
    %v78 = vsub.s32 %v75, %v77
    %v79 = vrot.slane %v72, %v78
    %v81 = vmul.f32 %v54, %v79
    %v83 = vlaneseq
    %v84 = vshrl.u32 %v83, 7
    %v85 = vsub.s32 0, %v84
    %v86 = vrot.slane %v81, %v85
    %v88 = vsub.f32 %v63, %v86
    %v89 = vsel %vm45, %v88, 0.0
    %v90 = vld [vmem:[#allocation5] sm:$0xf]
    %v92 = vrot.slane %v90, 1
    %v94 = vmax.f32 %v90, %v92
    %v95 = vrot.slane %v90, 2
    %v97 = vmax.f32 %v94, %v95
    %v98 = vrot.slane %v90, 3
    %v100 = vmax.f32 %v97, %v98
    %v101 = vsub.s32 %v39, 1
    %v102 = vsub.f32 %v90, %v100
    %v103 = vmul.f32 %v102, 1.442695
    %v104 = vpow.pop %v103
    %v105 = vadd.f32 %v104, 0.0
    %vm106 = vcmp.eq.s32.totalorder %v101, 0
    %v107 = vsel %vm106, %v102, 0.0
    %v109 = vrot.slane %v100, 7
    %v111 = vsub.f32 %v90, %v109
    %v112 = vmul.f32 %v111, 1.442695
    %v113 = vpow.pop %v112
    %v115 = vrot.slane %v113, 1
    %v117 = vadd.f32 %v105, %v115
    %vm118 = vcmp.eq.s32.totalorder %v101, 1
    %v121 = vunpack.c.l.s4 1966171168
    %v122 = vunpack.c.0.s8 %v121
    %v123 = vlaneseq
    %v124 = vshrl.u32 %v123, 7
    %v125 = vsub.s32 %v122, %v124
    %v126 = vrot.slane %v111, %v125
    %v127 = vcombine.high %v126, %v126
    %v129 = vunpack.c.l.s4 1966171168
    %v130 = vunpack.c.0.s8 %v129
    %v131 = vlaneseq
    %v132 = vshrl.u32 %v131, 7
    %v133 = vsub.s32 %v130, %v132
    %v134 = vrot.slane %v127, %v133
    %v136 = vsel %vm118, %v134, %v107
    %v137 = vrot.slane %v100, 6
    %v139 = vsub.f32 %v90, %v137
    %v140 = vmul.f32 %v139, 1.442695
    %v141 = vpow.pop %v140
    %v143 = vrot.slane %v141, 2
    %v145 = vadd.f32 %v117, %v143
    %vm146 = vcmp.eq.s32.totalorder %v101, 2
    %v149 = vunpack.c.l.s4 1966171168
    %v150 = vunpack.c.0.s8 %v149
    %v151 = vlaneseq
    %v152 = vshrl.u32 %v151, 7
    %v153 = vsub.s32 %v150, %v152
    %v154 = vrot.slane %v139, %v153
    %v156 = vunpack.c.l.s4 1966171168
    %v157 = vunpack.c.0.s8 %v156
    %v158 = vlaneseq
    %v159 = vshrl.u32 %v158, 7
    %v160 = vsub.s32 %v157, %v159
    %v161 = vrot.slane %v154, %v160
    %v162 = vcombine.high %v161, %v161
    %v164 = vsel %vm146, %v162, %v136
    %v165 = vrot.slane %v100, 5
    %v167 = vsub.f32 %v90, %v165
    %v168 = vmul.f32 %v167, 1.442695
    %v169 = vpow.pop %v168
    %v171 = vrot.slane %v169, 3
    %v173 = vadd.f32 %v145, %v171
    %vm174 = vcmp.eq.s32.totalorder %v101, 3
    %v177 = vunpack.c.l.s4 1966171168
    %v178 = vunpack.c.0.s8 %v177
    %v179 = vlaneseq
    %v180 = vshrl.u32 %v179, 7
    %v181 = vsub.s32 %v178, %v180
    %v182 = vrot.slane %v167, %v181
    %v183 = vcombine.high %v182, %v182
    %v185 = vunpack.c.l.s4 1966171168
    %v186 = vunpack.c.0.s8 %v185
    %v187 = vlaneseq
    %v188 = vshrl.u32 %v187, 7
    %v189 = vsub.s32 %v186, %v188
    %v190 = vrot.slane %v183, %v189
    %v191 = vcombine.high %v190, %v190
    %v193 = vsel %vm174, %v191, %v164
    %v194 = vlog2.pop %v173
    %v195 = vmul.f32 %v194, 0.6931472
    %v196 = vsub.f32 %v195, %v193
    %v197 = vsel %vm47, %v196, 0.0
    %v199 = vrot.slane %v89, 1
    %vm201 = vcmask 57344
    %v202 = vsel %vm201, %v199, 0.0
    %203 = vadd.xlane.f32.xlu0 %v202
    %v204 = vpop.xlane.xlu0 %203
    %v205 = vrot.slane %v204, 4
    %v206 = vadd.f32 %v204, %v205
    %v207 = vrot.slane %v206, 2
    %v208 = vadd.f32 %v206, %v207
    %v209 = vrot.slane %v208, 1
    %v210 = vadd.f32 %v208, %v209
    %s211 = vtos %v210
    %v212 = vsel %vm201, %v197, 0.0
    %213 = vadd.xlane.f32.xlu0 %v212
    %v214 = vpop.xlane.xlu0 %213
    %v215 = vrot.slane %v214, 4
    %v216 = vadd.f32 %v214, %v215
    %v217 = vrot.slane %v216, 2
    %v218 = vadd.f32 %v216, %v217
    %v219 = vrot.slane %v218, 1
    %v220 = vadd.f32 %v218, %v219
    %s221 = vtos %v220
    %v222 = vsel %vm47, 1.0, 0.0
    %v223 = vsel %vm201, %v222, 0.0
    %224 = vadd.xlane.f32.xlu0 %v223
    %v225 = vpop.xlane.xlu0 %224
    %v226 = vrot.slane %v225, 4
    %v227 = vadd.f32 %v225, %v226
    %v228 = vrot.slane %v227, 2
    %v229 = vadd.f32 %v227, %v228
    %v230 = vrot.slane %v229, 1
    %v231 = vadd.f32 %v229, %v230
    %s232 = vtos %v231
    %vm233 = vcmp.eq.s32.totalorder %v41, 0
    %vm234 = vcmp.eq.s32.totalorder %v41, 1
    %vm235 = vcmp.eq.s32.totalorder %v41, 2
    %v236 = vstv %s232
    %v237 = vsel %vm235, %v236, 0.0
    %v238 = vstv %s221
    %v239 = vsel %vm234, %v238, %v237
    %v240 = vstv %s211
    %v241 = vsel %vm233, %v240, %v239
    %242 = vst [vmem:[#allocation7] sm:$0x1] %v241
    // Predicated region
    $region22: #{tpu_custom_call.1} parent=1 // pred_check
      _
    $region23: #{tpu_custom_call.1} parent=1 // pred_check_branch
      %244 = sbr.rel (0) target = $region25
    $region24: #{tpu_custom_call.1} parent=1 // pred_region
      %s246 = ssub.s32 16, 16
      %247 = vsyncadd [#allocation4], %s246
      %s249 = sshll.u32 [#allocation7], 4
      %s250 = int_to_ptr.vmem [resolvable:$true] %s249
      %252 = dma.vmem_to_hbm [thread:$0]  %s250, 16, %s3, [#allocation4]
    $region25: #{tpu_custom_call.1} parent=1 // pred_fallthru
      _
    // Predicated region
    $region26: #{tpu_custom_call.1} parent=1 // pred_check
      _
    $region27: #{tpu_custom_call.1} parent=1 // pred_check_branch
      %254 = sbr.rel (0) target = $region29
    $region28: #{tpu_custom_call.1} parent=1 // pred_region
      %255 = dma.done [#allocation4], 16
    $region29: #{tpu_custom_call.1} parent=1 // pred_fallthru
      _
    %256 = vsyncpa [#allocation3], 1
    %257 = vsyncpa [#allocation6], 1
    %258 = vsyncpa [#allocation4], 1

</llo_original>
